<compile_context>
chip_gen: v6e
topology: v6e:2x2x1
jax: 0.10.0
libtpu: 0.0.40
codegen_flags: <defaults>
</compile_context>

<pallas_src>
import jax
import jax.numpy as jnp
from jax.experimental import pallas as pl
from jax.experimental.pallas import tpu as pltpu

_LN_EPS = 1e-5


def _actor_kernel(x_ref, w1_ref, ln1_ref, w2_ref, ln2_ref, w3b_ref, o_ref):
    mxu_dtype = w1_ref.dtype          # bf16 weights -> bf16 MXU inputs
    x = x_ref[...]

    def linear_ln_relu(h_in, w_ref, ln_ref):
        # ln_ref rows: [0]=bias, [1]=gamma, [2]=beta.  Only the MXU operands are
        # bf16; accumulation and all LayerNorm math stay f32.
        h = jnp.dot(h_in.astype(mxu_dtype), w_ref[...],
                    preferred_element_type=jnp.float32)
        h = h + ln_ref[0:1, :]
        mean = jnp.mean(h, axis=-1, keepdims=True)
        m2 = jnp.mean(h * h, axis=-1, keepdims=True)
        var = jnp.maximum(m2 - mean * mean, 0.0)   # single-pass biased variance
        h = (h - mean) * jax.lax.rsqrt(var + _LN_EPS)
        h = h * ln_ref[1:2, :] + ln_ref[2:3, :]
        return jnp.maximum(h, 0.0)

    h = linear_ln_relu(x, w1_ref, ln1_ref)
    h = linear_ln_relu(h, w2_ref, ln2_ref)

    # mu layer: rows [0:fc2] = weight (columns zero-padded to a multiple of 128
    # so the store below is lane-dense), row [fc2] = bias.
    k_in = w3b_ref.shape[0] - 1
    out = jnp.dot(h.astype(mxu_dtype), w3b_ref[0:k_in, :],
                  preferred_element_type=jnp.float32)
    out = out + w3b_ref[k_in:k_in + 1, :].astype(jnp.float32)
    o_ref[...] = jnp.tanh(out).astype(o_ref.dtype)   # tanh(0)=0 in pad columns


def actor_forward(state, packed, *, n_actions, tile_b=1024, core_parallel=False):
    """Run the whole actor MLP in a single pallas_call.

    `packed` is the output of `pack_params` (6 operands total incl. state).
    The batch dimension is tiled with a 1-D grid (partial last tile handled by
    Pallas, no host-side padding); weights / LN slabs use a constant index_map
    so they stay resident in VMEM across batch tiles.
    """
    B, input_dim = state.shape
    fc1 = packed["w1"].shape[1]
    fc2 = packed["w2"].shape[1]
    n_pad = packed["w3b"].shape[1]          # n_actions rounded up to 128

    tile_b = max(8, (tile_b // 8) * 8)      # keep batch tiles sublane-aligned
    tb = min(tile_b, B)
    if core_parallel:
        # Ensure >=2 grid steps so the CORE_PARALLEL batch axis can split
        # across both TensorCores (v7x).
        tb = min(tb, max(8, ((B + 1) // 2 + 7) // 8 * 8))
    grid = (pl.cdiv(B, tb),)

    const = lambda i: (0, 0)
    sem = (pltpu.CORE_PARALLEL,) if core_parallel else (pltpu.PARALLEL,)

    out = pl.pallas_call(
        _actor_kernel,
        out_shape=jax.ShapeDtypeStruct((B, n_pad), jnp.float32),
        grid=grid,
        in_specs=[
            pl.BlockSpec((tb, input_dim), lambda i: (i, 0)),   # activations: tiled over batch
            pl.BlockSpec((input_dim, fc1), const),             # resident weights (bf16)
            pl.BlockSpec((3, fc1), const),                     # [b1; g1; beta1] (f32)
            pl.BlockSpec((fc1, fc2), const),
            pl.BlockSpec((3, fc2), const),                     # [b2; g2; beta2] (f32)
            pl.BlockSpec((fc2 + 1, n_pad), const),             # [w3; b3] zero-padded to 128 cols
        ],
        out_specs=pl.BlockSpec((tb, n_pad), lambda i: (i, 0)),
        compiler_params=pltpu.CompilerParams(dimension_semantics=sem),
    )(state, packed["w1"], packed["ln1"], packed["w2"], packed["ln2"], packed["w3b"])

    return out[:, :n_actions]


def pack_params(p, *, weight_dtype=jnp.bfloat16):
    """Pack params once outside the hot path.

    * LN vectors packed into (3, dim) f32 slabs [bias; gamma; beta].
    * mu weight + bias packed into one slab whose output columns are
      zero-padded to a multiple of 128 (lane-dense output store).
    * Matmul operands cast to bf16 (f32 accumulation happens in-kernel).
    """
    n_actions = p["w3"].shape[1]
    n_pad = -(-n_actions // 128) * 128
    w3b = jnp.concatenate([p["w3"], p["b3"]], axis=0)            # (fc2+1, n_actions)
    w3b = jnp.pad(w3b, ((0, 0), (0, n_pad - n_actions)))         # zero cols -> tanh()=0
    return {
        "w1": p["w1"].astype(weight_dtype),
        "ln1": jnp.concatenate([p["b1"], p["g1"], p["beta1"]], axis=0),   # (3, fc1) f32
        "w2": p["w2"].astype(weight_dtype),
        "ln2": jnp.concatenate([p["b2"], p["g2"], p["beta2"]], axis=0),   # (3, fc2) f32
        "w3b": w3b.astype(weight_dtype),                                  # (fc2+1, n_pad)
    }


def init_params(key, input_dim, fc1_dims, fc2_dims, n_actions):
    """Deterministic init mirroring ActorNetwork.__init__ (uniform bounds)."""
    k = jax.random.split(key, 6)
    # PyTorch: f1 = 1/sqrt(fc1.weight.size()[0]) = 1/sqrt(fc1_dims)
    f1 = 1.0 / jnp.sqrt(jnp.float32(fc1_dims))
    f2 = 1.0 / jnp.sqrt(jnp.float32(fc2_dims))
    f3 = 0.003

    def U(kk, shape, bound):
        return jax.random.uniform(kk, shape, jnp.float32, -bound, bound)

    return {
        # weights stored [in, out] (transposed vs PyTorch [out, in])
        "w1": U(k[0], (input_dim, fc1_dims), f1),
        "b1": U(k[1], (1, fc1_dims), f1),
        "g1": jnp.ones((1, fc1_dims), jnp.float32),
        "beta1": jnp.zeros((1, fc1_dims), jnp.float32),
        "w2": U(k[2], (fc1_dims, fc2_dims), f2),
        "b2": U(k[3], (1, fc2_dims), f2),
        "g2": jnp.ones((1, fc2_dims), jnp.float32),
        "beta2": jnp.zeros((1, fc2_dims), jnp.float32),
        "w3": U(k[4], (fc2_dims, n_actions), f3),
        "b3": U(k[5], (1, n_actions), f3),
    }


def actor_forward_ref(state, params, eps=1e-5):
    """Pure-JAX f32 reference (original unquantized params)."""
    h = state @ params["w1"] + params["b1"]
    h = (h - h.mean(-1, keepdims=True)) * jax.lax.rsqrt(h.var(-1, keepdims=True) + eps)
    h = jnp.maximum(h * params["g1"] + params["beta1"], 0.0)
    h = h @ params["w2"] + params["b2"]
    h = (h - h.mean(-1, keepdims=True)) * jax.lax.rsqrt(h.var(-1, keepdims=True) + eps)
    h = jnp.maximum(h * params["g2"] + params["beta2"], 0.0)
    return jnp.tanh(h @ params["w3"] + params["b3"])


def actor_forward_ref_packed(state, packed, eps=1e-5):
    """Reference that mirrors the kernel's numerics (bf16 matmul operands,
    f32 accumulation / LN math) for tight correctness checks."""
    f32 = jnp.float32

    def mm(h, w):
        return jnp.dot(h.astype(w.dtype).astype(f32), w.astype(f32))

    def block(h, w, ln):
        h = mm(h, w) + ln[0:1]
        mean = h.mean(-1, keepdims=True)
        var = ((h - mean) ** 2).mean(-1, keepdims=True)
        h = (h - mean) * jax.lax.rsqrt(var + eps)
        return jnp.maximum(h * ln[1:2] + ln[2:3], 0.0)

    h = block(state, packed["w1"], packed["ln1"])
    h = block(h, packed["w2"], packed["ln2"])
    w3b = packed["w3b"]
    out = mm(h, w3b[:-1]) + w3b[-1:].astype(f32)
    return jnp.tanh(out)


if __name__ == "__main__":
    # Small shapes consistent with the module: input_dims=(8,), fc1=32, fc2=32,
    # n_actions=4, batch=2.
    B, INPUT_DIM, FC1, FC2, N_ACTIONS = 2, 8, 32, 32, 4

    key = jax.random.PRNGKey(0)
    pkey, xkey, xkey2 = jax.random.split(key, 3)
    params = init_params(pkey, INPUT_DIM, FC1, FC2, N_ACTIONS)
    packed = pack_params(params)

    # --- small batch (single block, grid=(1,)) ---
    state = jax.random.normal(xkey, (B, INPUT_DIM), jnp.float32)
    out = jax.block_until_ready(actor_forward(state, packed, n_actions=N_ACTIONS))
    assert out.shape == (B, N_ACTIONS)
    ref_q = actor_forward_ref_packed(state, packed)[:, :N_ACTIONS]
    assert jnp.allclose(out, ref_q, atol=1e-4, rtol=1e-4), (out, ref_q)
    ref_f32 = actor_forward_ref(state, params)
    assert jnp.allclose(out, ref_f32, atol=2e-3, rtol=2e-2), (out, ref_f32)

    # --- batched ragged path: batch grid + in-kernel partial last tile +
    #     resident weights + lane-dense 128-wide output store ---
    B2 = 260
    state2 = jax.random.normal(xkey2, (B2, INPUT_DIM), jnp.float32)
    out2 = jax.block_until_ready(
        actor_forward(state2, packed, n_actions=N_ACTIONS, tile_b=128))
    assert out2.shape == (B2, N_ACTIONS)
    ref2_q = actor_forward_ref_packed(state2, packed)[:, :N_ACTIONS]
    assert jnp.allclose(out2, ref2_q, atol=1e-4, rtol=1e-4)
    ref2_f32 = actor_forward_ref(state2, params)
    assert jnp.allclose(out2, ref2_f32, atol=2e-3, rtol=2e-2)

    print("KERNEL_OK")
</pallas_src>

<mosaic_0001>
module attributes {stable_mosaic.version = 11 : i64} {
  func.func @_actor_kernel(%arg0: i32, %arg1: memref<2x8xf32, #tpu.memory_space<vmem>>, %arg2: memref<8x32xbf16, #tpu.memory_space<vmem>>, %arg3: memref<3x32xf32, #tpu.memory_space<vmem>>, %arg4: memref<32x32xbf16, #tpu.memory_space<vmem>>, %arg5: memref<3x32xf32, #tpu.memory_space<vmem>>, %arg6: memref<33x128xbf16, #tpu.memory_space<vmem>>, %arg7: memref<2x128xf32, #tpu.memory_space<vmem>>) attributes {dimension_semantics = [#tpu.dimension_semantics<parallel>], iteration_bounds = array<i64: 1>, scalar_prefetch = 0 : i64, scratch_operands = 0 : i64, tpu.core_type = #tpu.core_type<tc>, window_params = [{transform_indices = @transform_0, window_bounds = array<i64: 2, 8>}, {pipeline_mode = #tpu.pipeline_mode<synchronous>, transform_indices = @transform_1, window_bounds = array<i64: 8, 32>}, {pipeline_mode = #tpu.pipeline_mode<synchronous>, transform_indices = @transform_2, window_bounds = array<i64: 3, 32>}, {pipeline_mode = #tpu.pipeline_mode<synchronous>, transform_indices = @transform_3, window_bounds = array<i64: 32, 32>}, {pipeline_mode = #tpu.pipeline_mode<synchronous>, transform_indices = @transform_4, window_bounds = array<i64: 3, 32>}, {pipeline_mode = #tpu.pipeline_mode<synchronous>, transform_indices = @transform_5, window_bounds = array<i64: 33, 128>}, {transform_indices = @transform_6, window_bounds = array<i64: 2, 128>}]} {
    %c0 = arith.constant 0 : index
    %c0_0 = arith.constant 0 : index
    %0 = vector.load %arg1[%c0, %c0_0] : memref<2x8xf32, #tpu.memory_space<vmem>>, vector<2x8xf32>
    %1 = arith.truncf %0 : vector<2x8xf32> to vector<2x8xbf16>
    %c0_1 = arith.constant 0 : index
    %c0_2 = arith.constant 0 : index
    %2 = vector.load %arg2[%c0_1, %c0_2] : memref<8x32xbf16, #tpu.memory_space<vmem>>, vector<8x32xbf16>
    %cst = arith.constant dense<0.000000e+00> : vector<2x32xf32>
    %3 = tpu.matmul %1, %2, %cst {dimension_numbers = #tpu.dot_dimension_numbers<[1], [0], [0], [1], [0, 0, 1, 1], [], []>} : vector<2x8xbf16>, vector<8x32xbf16>, vector<2x32xf32> -> vector<2x32xf32>
    %c0_3 = arith.constant 0 : index
    %c0_4 = arith.constant 0 : index
    %4 = vector.load %arg3[%c0_3, %c0_4] : memref<3x32xf32, #tpu.memory_space<vmem>>, vector<1x32xf32>
    %5 = vector.broadcast %4 : vector<1x32xf32> to vector<2x32xf32>
    %6 = arith.addf %3, %5 : vector<2x32xf32>
    %cst_5 = arith.constant dense<0.000000e+00> : vector<2xf32>
    %7 = vector.multi_reduction <add>, %6, %cst_5 [1] : vector<2x32xf32> to vector<2xf32>
    %8 = vector.shape_cast %7 : vector<2xf32> to vector<2x1xf32>
    %cst_6 = arith.constant 3.200000e+01 : f32
    %9 = vector.broadcast %cst_6 : f32 to vector<2x1xf32>
    %10 = arith.divf %8, %9 : vector<2x1xf32>
    %11 = arith.mulf %6, %6 : vector<2x32xf32>
    %cst_7 = arith.constant dense<0.000000e+00> : vector<2xf32>
    %12 = vector.multi_reduction <add>, %11, %cst_7 [1] : vector<2x32xf32> to vector<2xf32>
    %13 = vector.shape_cast %12 : vector<2xf32> to vector<2x1xf32>
    %cst_8 = arith.constant 3.200000e+01 : f32
    %14 = vector.broadcast %cst_8 : f32 to vector<2x1xf32>
    %15 = arith.divf %13, %14 : vector<2x1xf32>
    %16 = arith.mulf %10, %10 : vector<2x1xf32>
    %17 = arith.subf %15, %16 : vector<2x1xf32>
    %cst_9 = arith.constant 0.000000e+00 : f32
    %18 = vector.broadcast %cst_9 : f32 to vector<2x1xf32>
    %19 = arith.maximumf %17, %18 : vector<2x1xf32>
    %20 = vector.broadcast %10 : vector<2x1xf32> to vector<2x32xf32>
    %21 = arith.subf %6, %20 : vector<2x32xf32>
    %cst_10 = arith.constant 9.99999974E-6 : f32
    %22 = vector.broadcast %cst_10 : f32 to vector<2x1xf32>
    %23 = arith.addf %19, %22 : vector<2x1xf32>
    %24 = math.rsqrt %23 : vector<2x1xf32>
    %25 = vector.broadcast %24 : vector<2x1xf32> to vector<2x32xf32>
    %26 = arith.mulf %21, %25 : vector<2x32xf32>
    %c1 = arith.constant 1 : index
    %c0_11 = arith.constant 0 : index
    %27 = vector.load %arg3[%c1, %c0_11] : memref<3x32xf32, #tpu.memory_space<vmem>>, vector<1x32xf32>
    %28 = vector.broadcast %27 : vector<1x32xf32> to vector<2x32xf32>
    %29 = arith.mulf %26, %28 : vector<2x32xf32>
    %c2 = arith.constant 2 : index
    %c0_12 = arith.constant 0 : index
    %30 = vector.load %arg3[%c2, %c0_12] : memref<3x32xf32, #tpu.memory_space<vmem>>, vector<1x32xf32>
    %31 = vector.broadcast %30 : vector<1x32xf32> to vector<2x32xf32>
    %32 = arith.addf %29, %31 : vector<2x32xf32>
    %cst_13 = arith.constant 0.000000e+00 : f32
    %33 = vector.broadcast %cst_13 : f32 to vector<2x32xf32>
    %34 = arith.maximumf %32, %33 : vector<2x32xf32>
    %35 = arith.truncf %34 : vector<2x32xf32> to vector<2x32xbf16>
    %c0_14 = arith.constant 0 : index
    %c0_15 = arith.constant 0 : index
    %36 = vector.load %arg4[%c0_14, %c0_15] : memref<32x32xbf16, #tpu.memory_space<vmem>>, vector<32x32xbf16>
    %cst_16 = arith.constant dense<0.000000e+00> : vector<2x32xf32>
    %37 = tpu.matmul %35, %36, %cst_16 {dimension_numbers = #tpu.dot_dimension_numbers<[1], [0], [0], [1], [0, 0, 1, 1], [], []>} : vector<2x32xbf16>, vector<32x32xbf16>, vector<2x32xf32> -> vector<2x32xf32>
    %c0_17 = arith.constant 0 : index
    %c0_18 = arith.constant 0 : index
    %38 = vector.load %arg5[%c0_17, %c0_18] : memref<3x32xf32, #tpu.memory_space<vmem>>, vector<1x32xf32>
    %39 = vector.broadcast %38 : vector<1x32xf32> to vector<2x32xf32>
    %40 = arith.addf %37, %39 : vector<2x32xf32>
    %cst_19 = arith.constant dense<0.000000e+00> : vector<2xf32>
    %41 = vector.multi_reduction <add>, %40, %cst_19 [1] : vector<2x32xf32> to vector<2xf32>
    %42 = vector.shape_cast %41 : vector<2xf32> to vector<2x1xf32>
    %cst_20 = arith.constant 3.200000e+01 : f32
    %43 = vector.broadcast %cst_20 : f32 to vector<2x1xf32>
    %44 = arith.divf %42, %43 : vector<2x1xf32>
    %45 = arith.mulf %40, %40 : vector<2x32xf32>
    %cst_21 = arith.constant dense<0.000000e+00> : vector<2xf32>
    %46 = vector.multi_reduction <add>, %45, %cst_21 [1] : vector<2x32xf32> to vector<2xf32>
    %47 = vector.shape_cast %46 : vector<2xf32> to vector<2x1xf32>
    %cst_22 = arith.constant 3.200000e+01 : f32
    %48 = vector.broadcast %cst_22 : f32 to vector<2x1xf32>
    %49 = arith.divf %47, %48 : vector<2x1xf32>
    %50 = arith.mulf %44, %44 : vector<2x1xf32>
    %51 = arith.subf %49, %50 : vector<2x1xf32>
    %cst_23 = arith.constant 0.000000e+00 : f32
    %52 = vector.broadcast %cst_23 : f32 to vector<2x1xf32>
    %53 = arith.maximumf %51, %52 : vector<2x1xf32>
    %54 = vector.broadcast %44 : vector<2x1xf32> to vector<2x32xf32>
    %55 = arith.subf %40, %54 : vector<2x32xf32>
    %cst_24 = arith.constant 9.99999974E-6 : f32
    %56 = vector.broadcast %cst_24 : f32 to vector<2x1xf32>
    %57 = arith.addf %53, %56 : vector<2x1xf32>
    %58 = math.rsqrt %57 : vector<2x1xf32>
    %59 = vector.broadcast %58 : vector<2x1xf32> to vector<2x32xf32>
    %60 = arith.mulf %55, %59 : vector<2x32xf32>
    %c1_25 = arith.constant 1 : index
    %c0_26 = arith.constant 0 : index
    %61 = vector.load %arg5[%c1_25, %c0_26] : memref<3x32xf32, #tpu.memory_space<vmem>>, vector<1x32xf32>
    %62 = vector.broadcast %61 : vector<1x32xf32> to vector<2x32xf32>
    %63 = arith.mulf %60, %62 : vector<2x32xf32>
    %c2_27 = arith.constant 2 : index
    %c0_28 = arith.constant 0 : index
    %64 = vector.load %arg5[%c2_27, %c0_28] : memref<3x32xf32, #tpu.memory_space<vmem>>, vector<1x32xf32>
    %65 = vector.broadcast %64 : vector<1x32xf32> to vector<2x32xf32>
    %66 = arith.addf %63, %65 : vector<2x32xf32>
    %cst_29 = arith.constant 0.000000e+00 : f32
    %67 = vector.broadcast %cst_29 : f32 to vector<2x32xf32>
    %68 = arith.maximumf %66, %67 : vector<2x32xf32>
    %69 = arith.truncf %68 : vector<2x32xf32> to vector<2x32xbf16>
    %c0_30 = arith.constant 0 : index
    %c0_31 = arith.constant 0 : index
    %70 = vector.load %arg6[%c0_30, %c0_31] : memref<33x128xbf16, #tpu.memory_space<vmem>>, vector<32x128xbf16>
    %cst_32 = arith.constant dense<0.000000e+00> : vector<2x128xf32>
    %71 = tpu.matmul %69, %70, %cst_32 {dimension_numbers = #tpu.dot_dimension_numbers<[1], [0], [0], [1], [0, 0, 1, 1], [], []>} : vector<2x32xbf16>, vector<32x128xbf16>, vector<2x128xf32> -> vector<2x128xf32>
    %c32 = arith.constant 32 : index
    %c0_33 = arith.constant 0 : index
    %72 = vector.load %arg6[%c32, %c0_33] : memref<33x128xbf16, #tpu.memory_space<vmem>>, vector<1x128xbf16>
    %73 = arith.extf %72 : vector<1x128xbf16> to vector<1x128xf32>
    %74 = vector.broadcast %73 : vector<1x128xf32> to vector<2x128xf32>
    %75 = arith.addf %71, %74 : vector<2x128xf32>
    %76 = math.tanh %75 : vector<2x128xf32>
    %c0_34 = arith.constant 0 : index
    %c0_35 = arith.constant 0 : index
    %77 = vector.load %arg7[%c0_34, %c0_35] : memref<2x128xf32, #tpu.memory_space<vmem>>, vector<2x128xf32>
    tpu.vector_store %arg7[%c0_34, %c0_35], %76 {strides = array<i32>} : memref<2x128xf32, #tpu.memory_space<vmem>>, vector<2x128xf32>,
    return
  }
  func.func @transform_0(%arg0: i32) -> (i32, i32) {
    %c0_i32 = arith.constant 0 : i32
    %c0_i32_0 = arith.constant 0 : i32
    return %arg0, %c0_i32 : i32, i32
  }
  func.func @transform_1(%arg0: i32) -> (i32, i32) {
    %c0_i32 = arith.constant 0 : i32
    %c0_i32_0 = arith.constant 0 : i32
    %c0_i32_1 = arith.constant 0 : i32
    return %c0_i32, %c0_i32_0 : i32, i32
  }
  func.func @transform_2(%arg0: i32) -> (i32, i32) {
    %c0_i32 = arith.constant 0 : i32
    %c0_i32_0 = arith.constant 0 : i32
    %c0_i32_1 = arith.constant 0 : i32
    return %c0_i32, %c0_i32_0 : i32, i32
  }
  func.func @transform_3(%arg0: i32) -> (i32, i32) {
    %c0_i32 = arith.constant 0 : i32
    %c0_i32_0 = arith.constant 0 : i32
    %c0_i32_1 = arith.constant 0 : i32
    return %c0_i32, %c0_i32_0 : i32, i32
  }
  func.func @transform_4(%arg0: i32) -> (i32, i32) {
    %c0_i32 = arith.constant 0 : i32
    %c0_i32_0 = arith.constant 0 : i32
    %c0_i32_1 = arith.constant 0 : i32
    return %c0_i32, %c0_i32_0 : i32, i32
  }
  func.func @transform_5(%arg0: i32) -> (i32, i32) {
    %c0_i32 = arith.constant 0 : i32
    %c0_i32_0 = arith.constant 0 : i32
    %c0_i32_1 = arith.constant 0 : i32
    return %c0_i32, %c0_i32_0 : i32, i32
  }
  func.func @transform_6(%arg0: i32) -> (i32, i32) {
    %c0_i32 = arith.constant 0 : i32
    %c0_i32_0 = arith.constant 0 : i32
    return %arg0, %c0_i32 : i32, i32
  }
}

</mosaic_0001>

<llo_original>
// kernel: tpu_custom_call.1
$region0: #{tpu_custom_call.1}
  #allocation0 [shape = 'u32[]', space=smem, size = 0x4, offset = 0x4, fixed_abs, tag = 'smem constant byte address 0x4 - core index']
  #allocation1 [shape = 'u32[144,128]{1,0:T(1,128)}', space=vmem, size = 0x12000, scoped, tag = 'internal scratch']
  %s0 = inlined_call_operand.hbm [shape: f32[2,8], index: 0, kind: input, shape index: {}]
  %s1 = inlined_call_operand.hbm [shape: bf16[8,32], index: 1, kind: input, shape index: {}]
  %s2 = inlined_call_operand.hbm [shape: f32[3,32], index: 2, kind: input, shape index: {}]
  %s3 = inlined_call_operand.hbm [shape: bf16[32,32], index: 3, kind: input, shape index: {}]
  %s4 = inlined_call_operand.vmem [shape: f32[3,32], index: 4, kind: input, shape index: {}]
  %s5 = inlined_call_operand.hbm [shape: bf16[33,128], index: 5, kind: input, shape index: {}]
  %s6 = inlined_call_operand.hbm [shape: f32[2,128], index: 6, kind: output, shape index: {}]
  %s7 = sld [smem:[#allocation0]]
  $region54: #{tpu_custom_call.1} parent=0
    _
  %s9 = ssub.s32 1, %s7
  %s10 = scalar_select 0, %s9, %s7
  $region1: #{tpu_custom_call.1} parent=0
    #allocation2 [shape = 'u8[1024]{0}', space=vmem, size = 0x400, scoped, tag = 'input window, operand 0, single buffered']
    #allocation3 [shape = 's32[1]{0}', space=sflag, size = 0x4, scoped, tag = 'scoped memory for tpu_custom_call.1']
    #allocation4 [shape = 's32[1]{0}', space=sflag, size = 0x4, scoped, tag = 'scoped memory for tpu_custom_call.1']
    #allocation5 [shape = 'u8[2048]{0}', space=vmem, size = 0x800, scoped, tag = 'input window, operand 1, single buffered']
    #allocation6 [shape = 's32[1]{0}', space=sflag, size = 0x4, scoped, tag = 'scoped memory for tpu_custom_call.1']
    #allocation7 [shape = 'u8[2048]{0}', space=vmem, size = 0x800, scoped, tag = 'input window, operand 2, single buffered']
    #allocation8 [shape = 'u8[8192]{0}', space=vmem, size = 0x2000, scoped, tag = 'input window, operand 3, single buffered']
    #allocation9 [shape = 's32[1]{0}', space=sflag, size = 0x4, scoped, tag = 'scoped memory for tpu_custom_call.1']
    #allocation10 [shape = 'u8[10240]{0}', space=vmem, size = 0x2800, scoped, tag = 'input window, operand 5, single buffered']
    #allocation11 [shape = 'u8[1024]{0}', space=vmem, size = 0x400, scoped, tag = 'output window, operand 0, single buffered']
    %11 = vsyncpa [#allocation3], 0
    %12 = vsyncpa [#allocation6], 0
    %13 = vsyncpa [#allocation9], 0
    %14 = vsyncpa [#allocation4], 0
    // Predicated region
    $region2: #{tpu_custom_call.1} parent=1 // pred_check
      _
    $region3: #{tpu_custom_call.1} parent=1 // pred_check_branch
      %16 = sbr.rel (0) target = $region5
    $region4: #{tpu_custom_call.1} parent=1 // pred_region
      %s18 = ssub.s32 32, 32
      %19 = vsyncadd [#allocation3], %s18
      %s21 = sshll.u32 [#allocation2], 4
      %s22 = int_to_ptr.vmem [resolvable:$true] %s21
      %24 = dma.hbm_to_vmem [thread:$0]  %s0, 32, %s22, [#allocation3]
    $region5: #{tpu_custom_call.1} parent=1 // pred_fallthru
      _
    // Predicated region
    $region6: #{tpu_custom_call.1} parent=1 // pred_check
      _
    $region7: #{tpu_custom_call.1} parent=1 // pred_check_branch
      %26 = sbr.rel (0) target = $region9
    $region8: #{tpu_custom_call.1} parent=1 // pred_region
      %s28 = ssub.s32 64, 64
      %29 = vsyncadd [#allocation6], %s28
      %s31 = sshll.u32 [#allocation5], 4
      %s32 = int_to_ptr.vmem [resolvable:$true] %s31
      %34 = dma.hbm_to_vmem [thread:$0]  %s1, 64, %s32, [#allocation6]
    $region9: #{tpu_custom_call.1} parent=1 // pred_fallthru
      _
    // Predicated region
    $region10: #{tpu_custom_call.1} parent=1 // pred_check
      _
    $region11: #{tpu_custom_call.1} parent=1 // pred_check_branch
      %36 = sbr.rel (0) target = $region13
    $region12: #{tpu_custom_call.1} parent=1 // pred_region
      %s38 = ssub.s32 64, 64
      %39 = vsyncadd [#allocation6], %s38
      %s41 = sshll.u32 [#allocation7], 4
      %s42 = int_to_ptr.vmem [resolvable:$true] %s41
      %44 = dma.hbm_to_vmem [thread:$0]  %s2, 64, %s42, [#allocation6]
    $region13: #{tpu_custom_call.1} parent=1 // pred_fallthru
      _
    // Predicated region
    $region14: #{tpu_custom_call.1} parent=1 // pred_check
      _
    $region15: #{tpu_custom_call.1} parent=1 // pred_check_branch
      %46 = sbr.rel (0) target = $region17
    $region16: #{tpu_custom_call.1} parent=1 // pred_region
      %s48 = ssub.s32 256, 256
      %49 = vsyncadd [#allocation9], %s48
      %s50 = sshll.u32 [#allocation8], 4
      %s51 = int_to_ptr.vmem [resolvable:$true] %s50
      %56 = dma.hbm_to_vmem [thread:$0]  %s3, 256, %s51, [#allocation9], 64, 64, 4
    $region17: #{tpu_custom_call.1} parent=1 // pred_fallthru
      _
    // Predicated region
    $region18: #{tpu_custom_call.1} parent=1 // pred_check
      _
    $region19: #{tpu_custom_call.1} parent=1 // pred_check_branch
      %58 = sbr.rel (0) target = $region21
    $region20: #{tpu_custom_call.1} parent=1 // pred_region
      _
    $region21: #{tpu_custom_call.1} parent=1 // pred_fallthru
      _
    // Predicated region
    $region22: #{tpu_custom_call.1} parent=1 // pred_check
      _
    $region23: #{tpu_custom_call.1} parent=1 // pred_check_branch
      %60 = sbr.rel (0) target = $region25
    $region24: #{tpu_custom_call.1} parent=1 // pred_region
      %s62 = ssub.s32 320, 320
      %63 = vsyncadd [#allocation9], %s62
      %s64 = sshll.u32 [#allocation10], 4
      %s65 = int_to_ptr.vmem [resolvable:$true] %s64
      %70 = dma.hbm_to_vmem [thread:$0]  %s5, 320, %s65, [#allocation9], 64, 64, 4
    $region25: #{tpu_custom_call.1} parent=1 // pred_fallthru
      _
    // Predicated region
    $region26: #{tpu_custom_call.1} parent=1 // pred_check
      _
    $region27: #{tpu_custom_call.1} parent=1 // pred_check_branch
      %72 = sbr.rel (0) target = $region29
    $region28: #{tpu_custom_call.1} parent=1 // pred_region
      %73 = dma.done [#allocation3], 32
    $region29: #{tpu_custom_call.1} parent=1 // pred_fallthru
      _
    // Predicated region
    $region30: #{tpu_custom_call.1} parent=1 // pred_check
      _
    $region31: #{tpu_custom_call.1} parent=1 // pred_check_branch
      %75 = sbr.rel (0) target = $region33
    $region32: #{tpu_custom_call.1} parent=1 // pred_region
      %76 = dma.done [#allocation6], 64
    $region33: #{tpu_custom_call.1} parent=1 // pred_fallthru
      _
    // Predicated region
    $region34: #{tpu_custom_call.1} parent=1 // pred_check
      _
    $region35: #{tpu_custom_call.1} parent=1 // pred_check_branch
      %78 = sbr.rel (0) target = $region37
    $region36: #{tpu_custom_call.1} parent=1 // pred_region
      %79 = dma.done [#allocation6], 64
    $region37: #{tpu_custom_call.1} parent=1 // pred_fallthru
      _
    // Predicated region
    $region38: #{tpu_custom_call.1} parent=1 // pred_check
      _
    $region39: #{tpu_custom_call.1} parent=1 // pred_check_branch
      %81 = sbr.rel (0) target = $region41
    $region40: #{tpu_custom_call.1} parent=1 // pred_region
      %82 = dma.done [#allocation9], 256
    $region41: #{tpu_custom_call.1} parent=1 // pred_fallthru
      _
    // Predicated region
    $region42: #{tpu_custom_call.1} parent=1 // pred_check
      _
    $region43: #{tpu_custom_call.1} parent=1 // pred_check_branch
      %84 = sbr.rel (0) target = $region45
    $region44: #{tpu_custom_call.1} parent=1 // pred_region
      %85 = dma.done [#allocation9], 320
    $region45: #{tpu_custom_call.1} parent=1 // pred_fallthru
      _
    %v87 = vld [vmem:[#allocation2] sm:$0x3]
    %v88 = vpack.c.bf16 %v87, %v87
    %v89 = vld [vmem:[#allocation5] sm:$0xf]
    %v90 = vld [vmem:[#allocation7] sm:$0x1]
    %v91 = vlaneseq
    %v92 = vshrl.u32 %v91, 7
    %v93 = vsub.s32 0, %v92
    %v94 = vrot.slane %v90, %v93
    %vm95 = vcmask 64512
    %v97 = vsel %vm95, %v88, 0
    %vm99 = vcmask 1043456
    %v101 = vsel %vm99, %v89, 0
    %103 = vmatprep.subr.bf16.mxu0 0
    %104 = vmatpush1.bf16.msra.mxu0 0
    %105 = vmatprep.subr.bf16.mxu0 0
    %106 = vmatpush1.bf16.msra.mxu0 0
    %107 = vmatprep.subr.bf16.mxu0 0
    %108 = vmatpush1.bf16.msra.mxu0 0
    %109 = vmatprep.subr.bf16.mxu0 0
    %110 = vmatpush1.bf16.msra.mxu0 0
    %111 = vmatprep.subr.bf16.mxu0 0
    %112 = vmatpush1.bf16.msra.mxu0 0
    %113 = vmatprep.subr.bf16.mxu0 0
    %114 = vmatpush1.bf16.msra.mxu0 0
    %115 = vmatprep.subr.bf16.mxu0 0
    %116 = vmatpush1.bf16.msra.mxu0 0
    %117 = vmatprep.subr.bf16.mxu0 0
    %118 = vmatpush1.bf16.msra.mxu0 %v101
    %119 = vmatprep.subr.bf16.mxu0 0
    %120 = vmatpush2.bf16.msra.mxu0 0
    %121 = vmatprep.subr.bf16.mxu0 0
    %122 = vmatpush2.bf16.msra.mxu0 0
    %123 = vmatprep.subr.bf16.mxu0 0
    %124 = vmatpush2.bf16.msra.mxu0 0
    %125 = vmatprep.subr.bf16.mxu0 0
    %126 = vmatpush2.bf16.msra.mxu0 0
    %127 = vmatprep.subr.bf16.mxu0 0
    %128 = vmatpush2.bf16.msra.mxu0 0
    %129 = vmatprep.subr.bf16.mxu0 0
    %130 = vmatpush2.bf16.msra.mxu0 0
    %131 = vmatprep.subr.bf16.mxu0 0
    %132 = vmatpush2.bf16.msra.mxu0 0
    %133 = vmatprep.subr.bf16.mxu0 0
    %134 = vmatpush2.bf16.msra.mxu0 0
    %135 = vmatprep.mubr.bf16.mxu0 0
    %136 = vmatmul.mubr.bf16.gmra.mxu0 %v97
    %v137 = vpop.f32.mrf.mxu0
    %v138 = vadd.f32 %v94, %v137
    %v139 = vpop.f32.mrf.mxu0
    %v140 = vpop.f32.mrf.mxu0
    %v141 = vpop.f32.mrf.mxu0
    %142 = vdwg.mxu0
    %vm143 = vcmask 254976
    %v144 = vsel %vm143, %v138, 0.0
    %145 = vadd.xlane.f32.xlu0 %v144
    %v146 = vpop.xlane.xlu0 %145
    %v147 = vrcp.pop 32.0
    %v148 = vmul.f32 %v146, %v147
    %v149 = vmul.f32 %v138, %v138
    %v150 = vsel %vm143, %v149, 0.0
    %151 = vadd.xlane.f32.xlu0 %v150
    %v152 = vpop.xlane.xlu0 %151
    %v153 = vmul.f32 %v152, %v147
    %v154 = vmul.f32 %v148, %v148
    %v155 = vsub.f32 %v153, %v154
    %v156 = vmax.f32 %v155, 0.0
    %v157 = vsub.f32 %v138, %v148
    %v158 = vadd.f32 %v156, 1e-05
    %v159 = vrsqrt.pop %v158
    %v160 = vmul.f32 %v157, %v159
    %v161 = vld [vmem:[#allocation7 + $0x1] sm:$0x1]
    %v162 = vlaneseq
    %v163 = vshrl.u32 %v162, 7
    %v164 = vsub.s32 0, %v163
    %v165 = vrot.slane %v161, %v164
    %v166 = vmul.f32 %v160, %v165
    %v167 = vld [vmem:[#allocation7 + $0x2] sm:$0x1]
    %v168 = vlaneseq
    %v169 = vshrl.u32 %v168, 7
    %v170 = vsub.s32 0, %v169
    %v171 = vrot.slane %v167, %v170
    %v172 = vadd.f32 %v166, %v171
    %v173 = vmax.f32 %v172, 0.0
    %v174 = vpack.c.bf16 %v173, %v173
    %v175 = vld [vmem:[#allocation8] sm:$0xf]
    %v176 = vld [vmem:[#allocation8 + $0x4] sm:$0xf]
    %v177 = vld [vmem:[#allocation8 + $0x8] sm:$0xf]
    %v178 = vld [vmem:[#allocation8 + $0xc] sm:$0xf]
    %v179 = vld [vmem:[%s4] sm:$0x1]
    %v180 = vlaneseq
    %v181 = vshrl.u32 %v180, 7
    %v182 = vsub.s32 0, %v181
    %v183 = vrot.slane %v179, %v182
    %v188 = vunpack.c.l.b16 %v175
    %v189 = vunpack.c.l.b16 %v176
    %v190 = vunpack.c.l.b16 %v177
    %v191 = vunpack.c.l.b16 %v178
    %v192 = vpack.c.b16 %v189, %v188
    %v193 = vpack.c.b16 %v191, %v190
    %vm196 = vcmask 261120
    %v198 = vsel %vm196, %v174, 0
    %200 = vmatprep.subr.bf16.mxu0 0
    %201 = vmatpush1.bf16.msra.mxu0 0
    %202 = vmatprep.subr.bf16.mxu0 0
    %203 = vmatpush1.bf16.msra.mxu0 0
    %204 = vmatprep.subr.bf16.mxu0 0
    %205 = vmatpush1.bf16.msra.mxu0 0
    %206 = vmatprep.subr.bf16.mxu0 0
    %207 = vmatpush1.bf16.msra.mxu0 0
    %208 = vmatprep.subr.bf16.mxu0 0
    %209 = vmatpush1.bf16.msra.mxu0 0
    %210 = vmatprep.subr.bf16.mxu0 0
    %211 = vmatpush1.bf16.msra.mxu0 0
    %212 = vmatprep.subr.bf16.mxu0 0
    %213 = vmatpush1.bf16.msra.mxu0 %v193
    %214 = vmatprep.subr.bf16.mxu0 0
    %215 = vmatpush1.bf16.msra.mxu0 %v192
    %216 = vmatprep.subr.bf16.mxu0 0
    %217 = vmatpush2.bf16.msra.mxu0 0
    %218 = vmatprep.subr.bf16.mxu0 0
    %219 = vmatpush2.bf16.msra.mxu0 0
    %220 = vmatprep.subr.bf16.mxu0 0
    %221 = vmatpush2.bf16.msra.mxu0 0
    %222 = vmatprep.subr.bf16.mxu0 0
    %223 = vmatpush2.bf16.msra.mxu0 0
    %224 = vmatprep.subr.bf16.mxu0 0
    %225 = vmatpush2.bf16.msra.mxu0 0
    %226 = vmatprep.subr.bf16.mxu0 0
    %227 = vmatpush2.bf16.msra.mxu0 0
    %228 = vmatprep.subr.bf16.mxu0 0
    %229 = vmatpush2.bf16.msra.mxu0 0
    %230 = vmatprep.subr.bf16.mxu0 0
    %231 = vmatpush2.bf16.msra.mxu0 0
    %232 = vmatprep.mubr.bf16.mxu0 0
    %233 = vmatmul.mubr.bf16.gmra.mxu0 %v198
    %v234 = vpop.f32.mrf.mxu0
    %v235 = vadd.f32 %v183, %v234
    %v236 = vpop.f32.mrf.mxu0
    %v237 = vpop.f32.mrf.mxu0
    %v238 = vpop.f32.mrf.mxu0
    %239 = vdwg.mxu0
    %v240 = vsel %vm143, %v235, 0.0
    %241 = vadd.xlane.f32.xlu0 %v240
    %v242 = vpop.xlane.xlu0 %241
    %v243 = vmul.f32 %v242, %v147
    %v244 = vmul.f32 %v235, %v235
    %v245 = vsel %vm143, %v244, 0.0
    %246 = vadd.xlane.f32.xlu0 %v245
    %v247 = vpop.xlane.xlu0 %246
    %v248 = vmul.f32 %v247, %v147
    %v249 = vmul.f32 %v243, %v243
    %v250 = vsub.f32 %v248, %v249
    %v251 = vmax.f32 %v250, 0.0
    %v252 = vsub.f32 %v235, %v243
    %v253 = vadd.f32 %v251, 1e-05
    %v254 = vrsqrt.pop %v253
    %v255 = vmul.f32 %v252, %v254
    %v256 = vld [vmem:[%s4 + $0x1] sm:$0x1]
    %v257 = vlaneseq
    %v258 = vshrl.u32 %v257, 7
    %v259 = vsub.s32 0, %v258
    %v260 = vrot.slane %v256, %v259
    %v261 = vmul.f32 %v255, %v260
    %v262 = vld [vmem:[%s4 + $0x2] sm:$0x1]
    %v263 = vlaneseq
    %v264 = vshrl.u32 %v263, 7
    %v265 = vsub.s32 0, %v264
    %v266 = vrot.slane %v262, %v265
    %v267 = vadd.f32 %v261, %v266
    %v268 = vmax.f32 %v267, 0.0
    %v269 = vpack.c.bf16 %v268, %v268
    %v270 = vld [vmem:[#allocation10] sm:$0xf]
    %v271 = vld [vmem:[#allocation10 + $0x4] sm:$0xf]
    %v272 = vld [vmem:[#allocation10 + $0x8] sm:$0xf]
    %v273 = vld [vmem:[#allocation10 + $0xc] sm:$0xf]
    %v274 = vld [vmem:[#allocation10 + $0x10] sm:$0x1]
    %v275 = vunpack.c.l.bf16 %v274
    %v276 = vlaneseq
    %v277 = vshrl.u32 %v276, 7
    %v278 = vsub.s32 0, %v277
    %v279 = vrot.slane %v275, %v278
    %v284 = vunpack.c.l.b16 %v270
    %v285 = vunpack.c.l.b16 %v271
    %v286 = vunpack.c.l.b16 %v272
    %v287 = vunpack.c.l.b16 %v273
    %v288 = vpack.c.b16 %v285, %v284
    %v289 = vpack.c.b16 %v287, %v286
    %v293 = vsel %vm196, %v269, 0
    %295 = vmatprep.subr.bf16.mxu0 0
    %296 = vmatpush1.bf16.msra.mxu0 0
    %297 = vmatprep.subr.bf16.mxu0 0
    %298 = vmatpush1.bf16.msra.mxu0 0
    %299 = vmatprep.subr.bf16.mxu0 0
    %300 = vmatpush1.bf16.msra.mxu0 0
    %301 = vmatprep.subr.bf16.mxu0 0
    %302 = vmatpush1.bf16.msra.mxu0 0
    %303 = vmatprep.subr.bf16.mxu0 0
    %304 = vmatpush1.bf16.msra.mxu0 0
    %305 = vmatprep.subr.bf16.mxu0 0
    %306 = vmatpush1.bf16.msra.mxu0 0
    %307 = vmatprep.subr.bf16.mxu0 0
    %308 = vmatpush1.bf16.msra.mxu0 %v289
    %309 = vmatprep.subr.bf16.mxu0 0
    %310 = vmatpush1.bf16.msra.mxu0 %v288
    %311 = vmatprep.subr.bf16.mxu0 0
    %312 = vmatpush2.bf16.msra.mxu0 0
    %313 = vmatprep.subr.bf16.mxu0 0
    %314 = vmatpush2.bf16.msra.mxu0 0
    %315 = vmatprep.subr.bf16.mxu0 0
    %316 = vmatpush2.bf16.msra.mxu0 0
    %317 = vmatprep.subr.bf16.mxu0 0
    %318 = vmatpush2.bf16.msra.mxu0 0
    %319 = vmatprep.subr.bf16.mxu0 0
    %320 = vmatpush2.bf16.msra.mxu0 0
    %321 = vmatprep.subr.bf16.mxu0 0
    %322 = vmatpush2.bf16.msra.mxu0 0
    %323 = vmatprep.subr.bf16.mxu0 0
    %324 = vmatpush2.bf16.msra.mxu0 0
    %325 = vmatprep.subr.bf16.mxu0 0
    %326 = vmatpush2.bf16.msra.mxu0 0
    %327 = vmatprep.mubr.bf16.mxu0 0
    %328 = vmatmul.mubr.bf16.gmra.mxu0 %v293
    %v329 = vpop.f32.mrf.mxu0
    %v330 = vadd.f32 %v279, %v329
    %v331 = vpop.f32.mrf.mxu0
    %v332 = vpop.f32.mrf.mxu0
    %v333 = vpop.f32.mrf.mxu0
    %334 = vdwg.mxu0
    %v335 = vtanh.pop %v330
    %336 = vst [vmem:[#allocation11] sm:$0x3] %v335
    // Predicated region
    $region46: #{tpu_custom_call.1} parent=1 // pred_check
      _
    $region47: #{tpu_custom_call.1} parent=1 // pred_check_branch
      %338 = sbr.rel (0) target = $region49
    $region48: #{tpu_custom_call.1} parent=1 // pred_region
      %s340 = ssub.s32 32, 32
      %341 = vsyncadd [#allocation4], %s340
      %s343 = sshll.u32 [#allocation11], 4
      %s344 = int_to_ptr.vmem [resolvable:$true] %s343
      %346 = dma.vmem_to_hbm [thread:$0]  %s344, 32, %s6, [#allocation4]
    $region49: #{tpu_custom_call.1} parent=1 // pred_fallthru
      _
    // Predicated region
    $region50: #{tpu_custom_call.1} parent=1 // pred_check
      _
    $region51: #{tpu_custom_call.1} parent=1 // pred_check_branch
      %348 = sbr.rel (0) target = $region53
    $region52: #{tpu_custom_call.1} parent=1 // pred_region
      %349 = dma.done [#allocation4], 32
    $region53: #{tpu_custom_call.1} parent=1 // pred_fallthru
      _
    %350 = vsyncpa [#allocation3], 1
    %351 = vsyncpa [#allocation6], 1
    %352 = vsyncpa [#allocation9], 1
    %353 = vsyncpa [#allocation4], 1

</llo_original>
